<compile_context>
chip_gen: v7x
topology: tpu7x:2x2x1
jax: 0.10.0
libtpu: 0.0.40
codegen_flags: <defaults>
</compile_context>

<pallas_src>
import jax
import jax.numpy as jnp
from jax.experimental import pallas as pl
from jax.experimental.pallas import tpu as pltpu


_LANE = 128
_SUBLANE = 8


def _softmax_rows_kernel(x_ref, o_ref):
    # Block: (TR, HW) — numerically stable softmax along the last (lane) axis.
    x = x_ref[...].astype(jnp.float32)
    m = jnp.max(x, axis=-1, keepdims=True)
    e = jnp.exp(x - m)
    s = jnp.sum(e, axis=-1, keepdims=True)
    inv = pl.reciprocal(s, approx=True)      # EUP vrcp (free slot in a mem-bound kernel)
    inv = inv * (2.0 - s * inv)              # one Newton step -> ~full f32 precision
    o_ref[...] = (e * inv).astype(o_ref.dtype)


def _round_up(x, m):
    return (x + m - 1) // m * m


def _vmem_capacity_bytes():
    """Trace-time VMEM capacity query with a conservative (v7x) fallback."""
    try:
        return int(pltpu.get_tpu_info().vmem_capacity_bytes)
    except Exception:
        return 64 << 20


def layerwise_softmax(x, *, target_block_bytes=None):
    """x: (B, C, H, W) -> softmax over H*W per (b, c); same shape/dtype."""
    assert jnp.issubdtype(x.dtype, jnp.floating), "softmax expects a float dtype"
    B, C, H, W = x.shape
    HW = H * W
    R = B * C

    # Collapse (B, C) into a single row axis (pure metadata reshape for NCHW).
    x_rows = x.reshape(R, HW)

    # Generation-aware block sizing / VMEM cap.
    vmem_cap = _vmem_capacity_bytes()
    if vmem_cap <= (64 << 20):          # v7x: 64 MiB VMEM per TensorCore
        blk_bytes = 4 << 20
        vmem_clamp = 48 << 20
    else:                               # v5e / v6e: 128 MiB VMEM
        blk_bytes = 6 << 20
        vmem_clamp = 96 << 20
    if target_block_bytes is not None:
        blk_bytes = target_block_bytes

    # Physical lane footprint per row (layout pads the last dim to 128 lanes
    # in VMEM even though the logical block is (TR, HW)); used only for sizing.
    HWp = _round_up(HW, _LANE)

    # Row tile: multiple of 8 sublanes, sized so the block's f32 footprint is
    # ~<= blk_bytes ...
    rows_fitting = max(blk_bytes // (HWp * 4), 1)
    TR = max(_SUBLANE, (rows_fitting // _SUBLANE) * _SUBLANE)
    # ... but capped so the grid keeps >= ~8 steps whenever R allows it
    # (feeds v7x's two TensorCores via the "parallel" axis and keeps the
    # double-buffered DMA pipeline busy); free since the op stays mem-bound.
    min_steps = 8
    tr_cap = max(_SUBLANE, _round_up(-(-R // min_steps), _SUBLANE))
    TR = min(TR, tr_cap)
    TR = min(TR, _round_up(R, _SUBLANE))
    grid_rows = pl.cdiv(R, TR)  # last block is clipped if TR doesn't divide R

    # Tight scoped-VMEM budget: 2x double-buffered input + 2x double-buffered
    # output blocks + ~2 f32 temporaries (upcast + exp), 1.25x + 4 MiB headroom.
    itemsize = jnp.dtype(x.dtype).itemsize
    io_block = TR * HWp * itemsize
    f32_block = TR * HWp * 4
    vmem_bytes = int(1.25 * (2 * io_block + 2 * io_block + 2 * f32_block)) + (4 << 20)
    vmem_bytes = int(min(max(vmem_bytes, 32 << 20), vmem_clamp))

    out_rows = pl.pallas_call(
        _softmax_rows_kernel,
        out_shape=jax.ShapeDtypeStruct((R, HW), x.dtype),
        grid_spec=pltpu.PrefetchScalarGridSpec(
            num_scalar_prefetch=0,
            grid=(grid_rows,),
            # Last block dim == full array dim (HW), so ragged H*W needs no pad.
            in_specs=[pl.BlockSpec((TR, HW), lambda i: (i, 0))],
            out_specs=pl.BlockSpec((TR, HW), lambda i: (i, 0)),
        ),
        compiler_params=pltpu.CompilerParams(
            dimension_semantics=("parallel",),
            vmem_limit_bytes=vmem_bytes,
        ),
    )(x_rows)

    return out_rows.reshape(B, C, H, W)


if __name__ == "__main__":
    key = jax.random.PRNGKey(0)

    # Case 1: lane-aligned spatial size (H*W = 256, multiple of 128).
    B, C, H, W = 2, 4, 16, 16
    x = jax.random.normal(key, (B, C, H, W), dtype=jnp.float32)
    out = jax.block_until_ready(layerwise_softmax(x))
    ref = jax.nn.softmax(x.reshape(B, C, -1), axis=2).reshape(B, C, H, W)
    assert out.shape == x.shape and out.dtype == x.dtype
    assert jnp.allclose(out, ref, atol=1e-6, rtol=1e-5)

    # Case 2: ragged spatial size (H*W = 196) exercising the masked lane tail.
    B2, C2, H2, W2 = 2, 3, 14, 14
    x2 = jax.random.normal(jax.random.PRNGKey(1), (B2, C2, H2, W2),
                           dtype=jnp.float32)
    out2 = jax.block_until_ready(layerwise_softmax(x2))
    ref2 = jax.nn.softmax(x2.reshape(B2, C2, -1), axis=2).reshape(B2, C2, H2, W2)
    assert out2.shape == x2.shape and out2.dtype == x2.dtype
    assert jnp.allclose(out2, ref2, atol=1e-6, rtol=1e-5)

    # Case 3: enough rows (B*C = 64) to exercise the multi-step row grid.
    B3, C3, H3, W3 = 8, 8, 7, 7
    x3 = jax.random.normal(jax.random.PRNGKey(2), (B3, C3, H3, W3),
                           dtype=jnp.float32)
    out3 = jax.block_until_ready(layerwise_softmax(x3))
    ref3 = jax.nn.softmax(x3.reshape(B3, C3, -1), axis=2).reshape(B3, C3, H3, W3)
    assert jnp.allclose(out3, ref3, atol=1e-6, rtol=1e-5)

    print("KERNEL_OK")
</pallas_src>

<mosaic_0001>
module attributes {stable_mosaic.version = 11 : i64} {
  func.func @_softmax_rows_kernel(%arg0: i32, %arg1: memref<8x256xf32, #tpu.memory_space<vmem>>, %arg2: memref<8x256xf32, #tpu.memory_space<vmem>>) attributes {dimension_semantics = [#tpu.dimension_semantics<parallel>], iteration_bounds = array<i64: 1>, scalar_prefetch = 0 : i64, scratch_operands = 0 : i64, tpu.core_type = #tpu.core_type<tc>, window_params = [{transform_indices = @transform_0, window_bounds = array<i64: 8, 256>}, {transform_indices = @transform_1, window_bounds = array<i64: 8, 256>}]} {
    %c0 = arith.constant 0 : index
    %c0_0 = arith.constant 0 : index
    %0 = vector.load %arg1[%c0, %c0_0] : memref<8x256xf32, #tpu.memory_space<vmem>>, vector<8x256xf32>
    %cst = arith.constant dense<0xFF800000> : vector<8xf32>
    %1 = vector.multi_reduction <maximumf>, %0, %cst [1] : vector<8x256xf32> to vector<8xf32>
    %2 = vector.shape_cast %1 : vector<8xf32> to vector<8x1xf32>
    %3 = vector.broadcast %2 : vector<8x1xf32> to vector<8x256xf32>
    %4 = arith.subf %0, %3 : vector<8x256xf32>
    %5 = math.exp %4 : vector<8x256xf32>
    %cst_1 = arith.constant dense<0.000000e+00> : vector<8xf32>
    %6 = vector.multi_reduction <add>, %5, %cst_1 [1] : vector<8x256xf32> to vector<8xf32>
    %7 = vector.shape_cast %6 : vector<8xf32> to vector<8x1xf32>
    %8 = tpu.reciprocal %7 {approx = true} : vector<8x1xf32> -> vector<8x1xf32>
    %9 = arith.mulf %7, %8 : vector<8x1xf32>
    %cst_2 = arith.constant 2.000000e+00 : f32
    %10 = vector.broadcast %cst_2 : f32 to vector<8x1xf32>
    %11 = arith.subf %10, %9 : vector<8x1xf32>
    %12 = arith.mulf %8, %11 : vector<8x1xf32>
    %13 = vector.broadcast %12 : vector<8x1xf32> to vector<8x256xf32>
    %14 = arith.mulf %5, %13 : vector<8x256xf32>
    %c0_3 = arith.constant 0 : index
    %c0_4 = arith.constant 0 : index
    %15 = vector.load %arg2[%c0_3, %c0_4] : memref<8x256xf32, #tpu.memory_space<vmem>>, vector<8x256xf32>
    tpu.vector_store %arg2[%c0_3, %c0_4], %14 {strides = array<i32>} : memref<8x256xf32, #tpu.memory_space<vmem>>, vector<8x256xf32>,
    return
  }
  func.func @transform_0(%arg0: i32) -> (i32, i32) {
    %c0_i32 = arith.constant 0 : i32
    %c0_i32_0 = arith.constant 0 : i32
    return %arg0, %c0_i32 : i32, i32
  }
  func.func @transform_1(%arg0: i32) -> (i32, i32) {
    %c0_i32 = arith.constant 0 : i32
    %c0_i32_0 = arith.constant 0 : i32
    return %arg0, %c0_i32 : i32, i32
  }
}

</mosaic_0001>

<llo_original>
// kernel: tpu_custom_call.1
$region0: #{tpu_custom_call.1}
  #allocation0 [shape = 'u32[]', space=smem, size = 0x4, offset = 0x4, fixed_abs, tag = 'smem constant byte address 0x4 - core index']
  #allocation1 [shape = 'u32[144,128]{1,0:T(1,128)}', space=vmem, size = 0x12000, scoped, tag = 'internal scratch']
  %s0 = inlined_call_operand.hbm [shape: f32[8,256], index: 0, kind: input, shape index: {}]
  %s1 = inlined_call_operand.hbm [shape: f32[8,256], index: 1, kind: output, shape index: {}]
  %s2 = sld [smem:[#allocation0]]
  $region18: #{tpu_custom_call.1} parent=0
    _
  %s4 = ssub.s32 1, %s2
  %s5 = scalar_select 0, %s4, %s2
  $region1: #{tpu_custom_call.1} parent=0
    #allocation2 [shape = 'u8[8192]{0}', space=vmem, size = 0x2000, scoped, tag = 'input window, operand 0, single buffered']
    #allocation3 [shape = 's32[1]{0}', space=sflag, size = 0x4, scoped, tag = 'scoped memory for tpu_custom_call.1']
    #allocation4 [shape = 's32[1]{0}', space=sflag, size = 0x4, scoped, tag = 'scoped memory for tpu_custom_call.1']
    #allocation5 [shape = 'u8[8192]{0}', space=vmem, size = 0x2000, scoped, tag = 'output window, operand 0, single buffered']
    %6 = vsyncpa [#allocation3], 0
    %7 = vsyncpa [#allocation4], 0
    // Predicated region
    $region2: #{tpu_custom_call.1} parent=1 // pred_check
      _
    $region3: #{tpu_custom_call.1} parent=1 // pred_check_branch
      %9 = sbr.rel (0) target = $region5
    $region4: #{tpu_custom_call.1} parent=1 // pred_region
      %s11 = ssub.s32 256, 256
      %12 = vsyncadd [#allocation3], %s11
      %s14 = sshll.u32 [#allocation2], 4
      %s15 = int_to_ptr.vmem [resolvable:$true] %s14
      %17 = dma.hbm_to_vmem [thread:$0]  %s0, 256, %s15, [#allocation3]
    $region5: #{tpu_custom_call.1} parent=1 // pred_fallthru
      _
    // Predicated region
    $region6: #{tpu_custom_call.1} parent=1 // pred_check
      _
    $region7: #{tpu_custom_call.1} parent=1 // pred_check_branch
      %19 = sbr.rel (0) target = $region9
    $region8: #{tpu_custom_call.1} parent=1 // pred_region
      %20 = dma.done [#allocation3], 256
    $region9: #{tpu_custom_call.1} parent=1 // pred_fallthru
      _
    %v21 = vld [vmem:[#allocation2] sm:$0xff]
    %v22 = vld [vmem:[#allocation2 + $0x8] sm:$0xff]
    %v23 = vmax.f32 %v21, %v22
    %24 = vmax.xlane.f32.xlu0 %v23
    %v25 = vpop.xlane.xlu0 %24
    %v26 = vsub.f32 %v21, %v25
    %v27 = vsub.f32 %v22, %v25
    %v28 = vmul.f32 %v26, 1.442695
    %v29 = vpow.pop %v28
    %v30 = vmul.f32 %v27, 1.442695
    %v31 = vpow.pop %v30
    %v32 = vadd.f32 %v29, %v31
    %33 = vadd.xlane.f32.xlu0 %v32
    %v34 = vpop.xlane.xlu0 %33
    %v35 = vrcp.pop %v34
    %v36 = vmul.f32 %v34, %v35
    %v37 = vsub.f32 2.0, %v36
    %v38 = vmul.f32 %v35, %v37
    %v39 = vmul.f32 %v29, %v38
    %v40 = vmul.f32 %v31, %v38
    %41 = vst [vmem:[#allocation5] sm:$0xff] %v39
    %42 = vst [vmem:[#allocation5 + $0x8] sm:$0xff] %v40
    // Predicated region
    $region10: #{tpu_custom_call.1} parent=1 // pred_check
      _
    $region11: #{tpu_custom_call.1} parent=1 // pred_check_branch
      %44 = sbr.rel (0) target = $region13
    $region12: #{tpu_custom_call.1} parent=1 // pred_region
      %s46 = ssub.s32 256, 256
      %47 = vsyncadd [#allocation4], %s46
      %s49 = sshll.u32 [#allocation5], 4
      %s50 = int_to_ptr.vmem [resolvable:$true] %s49
      %52 = dma.vmem_to_hbm [thread:$0]  %s50, 256, %s1, [#allocation4]
    $region13: #{tpu_custom_call.1} parent=1 // pred_fallthru
      _
    // Predicated region
    $region14: #{tpu_custom_call.1} parent=1 // pred_check
      _
    $region15: #{tpu_custom_call.1} parent=1 // pred_check_branch
      %54 = sbr.rel (0) target = $region17
    $region16: #{tpu_custom_call.1} parent=1 // pred_region
      %55 = dma.done [#allocation4], 256
    $region17: #{tpu_custom_call.1} parent=1 // pred_fallthru
      _
    %56 = vsyncpa [#allocation3], 1
    %57 = vsyncpa [#allocation4], 1

</llo_original>
